<compile_context>
chip_gen: v7x
topology: tpu7x:2x2x1
jax: 0.10.0
libtpu: 0.0.40
codegen_flags: <defaults>
</compile_context>

<pallas_src>
import jax
import jax.numpy as jnp
from jax.experimental import pallas as pl
from jax.experimental.pallas import tpu as pltpu

# Target ~2-4 MiB per block: measured f32 elementwise kernels hit ~85% of the
# HBM roofline at 512-row (2 MiB) blocks vs ~29% at 128-row blocks, since each
# grid step carries ~0.35 us of fixed overhead.
_TARGET_BLOCK_BYTES = 3 * 1024 * 1024


def linreg_kernel(w_ref, b_ref, x_ref, o_ref):
    # w_ref / b_ref live in SMEM as (1, 1) scalars; x_ref / o_ref are VMEM tiles.
    w = w_ref[0, 0]
    b = b_ref[0, 0]
    # Compute in f32 (weight/bias are f32), cast back to the output dtype so
    # bf16 inputs/outputs also round-trip correctly. Pure VPU FMA — this op is
    # ~0.25 flop/byte, strictly HBM-bound; the MXU has no role here.
    y = w * x_ref[...].astype(jnp.float32) + b
    o_ref[...] = y.astype(o_ref.dtype)


def _pick_tile(total: int, base: int, cap: int) -> int:
    """Largest multiple of `base` that divides `total` and is <= cap.

    Falls back to the full extent (always a legal TPU block dim) when no such
    tile exists (e.g. `total` not a multiple of `base`).
    """
    if total % base != 0:
        return total
    cap = max(base, min(cap, total))
    t = cap - (cap % base)
    while t >= base:
        if total % t == 0:
            return t
        t -= base
    return total


def linear_regression(x: jnp.ndarray, weight: jnp.ndarray,
                      bias: jnp.ndarray) -> jnp.ndarray:
    """y = weight * x + bias, elementwise, with scalar weight/bias."""
    N, D = x.shape
    itemsize = jnp.dtype(x.dtype).itemsize

    # Lane axis: keep blocks lane-dense (multiple of 128) so stores are
    # unmasked vst, but cap the D tile so block bytes don't scale unboundedly
    # with wide D (avoids blowing the scoped-VMEM limit, esp. v7x's 64 MiB).
    tile_d = _pick_tile(D, 128, 2048)

    # Sublane axis: pick rows so tile_n * tile_d * itemsize ~ _TARGET_BLOCK_BYTES.
    row_cap = max(8, _TARGET_BLOCK_BYTES // max(1, tile_d * itemsize))
    tile_n = _pick_tile(N, 8, row_cap)

    # Keep the grid >= 2 steps when possible so v7x's two TensorCores both get
    # work (grid axes are marked "parallel" below).
    if (N // tile_n) * (D // tile_d) < 2 and tile_n >= 16 and tile_n % 16 == 0:
        tile_n //= 2

    grid = (N // tile_n, D // tile_d)

    w2 = weight.reshape(1, 1).astype(jnp.float32)
    b2 = bias.reshape(1, 1).astype(jnp.float32)

    # Advisory hint: memory-bound (read + write N*D elements, 2 flops each).
    cost = pl.CostEstimate(flops=2 * N * D,
                           transcendentals=0,
                           bytes_accessed=2 * N * D * itemsize)

    return pl.pallas_call(
        linreg_kernel,
        out_shape=jax.ShapeDtypeStruct((N, D), x.dtype),
        grid=grid,
        in_specs=[
            pl.BlockSpec(memory_space=pltpu.SMEM),                # weight scalar
            pl.BlockSpec(memory_space=pltpu.SMEM),                # bias scalar
            pl.BlockSpec((tile_n, tile_d), lambda i, j: (i, j)),  # x tile
        ],
        out_specs=pl.BlockSpec((tile_n, tile_d), lambda i, j: (i, j)),
        compiler_params=pltpu.CompilerParams(
            dimension_semantics=("parallel", "parallel"),
            # Raise above the 16/32 MiB scoped defaults so ~3 MiB blocks
            # double-buffered for both x and y fit comfortably; stays well
            # under v7x's 64 MiB physical VMEM.
            vmem_limit_bytes=48 << 20,
        ),
        cost_estimate=cost,
    )(w2, b2, x)


if __name__ == "__main__":
    key = jax.random.PRNGKey(0)
    kx, kw, kb = jax.random.split(key, 3)

    # Small shapes consistent with the module's elementwise forward.
    x = jax.random.normal(kx, (8, 128), dtype=jnp.float32)
    weight = jax.random.normal(kw, (1,), dtype=jnp.float32)   # torch.randn(1)
    bias = jax.random.normal(kb, (1,), dtype=jnp.float32)     # torch.randn(1)

    y = jax.block_until_ready(linear_regression(x, weight, bias))
    y_ref = weight[0] * x + bias[0]
    assert y.shape == x.shape and y.dtype == x.dtype
    assert jnp.allclose(y, y_ref, rtol=1e-6, atol=1e-6)

    # Also exercise the multi-block path (grid > 1 step) at a modest shape.
    x2 = jax.random.normal(kx, (256, 256), dtype=jnp.float32)
    y2 = jax.block_until_ready(linear_regression(x2, weight, bias))
    assert jnp.allclose(y2, weight[0] * x2 + bias[0], rtol=1e-6, atol=1e-6)

    print("KERNEL_OK")
</pallas_src>

<mosaic_0001>
module attributes {stable_mosaic.version = 11 : i64} {
  func.func @linreg_kernel(%arg0: i32, %arg1: i32, %arg2: memref<1x1xf32, #tpu.memory_space<smem>>, %arg3: memref<1x1xf32, #tpu.memory_space<smem>>, %arg4: memref<8x128xf32, #tpu.memory_space<vmem>>, %arg5: memref<8x128xf32, #tpu.memory_space<vmem>>) attributes {dimension_semantics = [#tpu.dimension_semantics<parallel>, #tpu.dimension_semantics<parallel>], iteration_bounds = array<i64: 1, 1>, scalar_prefetch = 0 : i64, scratch_operands = 0 : i64, tpu.core_type = #tpu.core_type<tc>, window_params = [{transform_indices = @transform_0, window_bounds = array<i64: 1, 1>}, {transform_indices = @transform_1, window_bounds = array<i64: 1, 1>}, {transform_indices = @transform_2, window_bounds = array<i64: 8, 128>}, {transform_indices = @transform_3, window_bounds = array<i64: 8, 128>}]} {
    %c0 = arith.constant 0 : index
    %c0_0 = arith.constant 0 : index
    %0 = memref.load %arg2[%c0, %c0_0] : memref<1x1xf32, #tpu.memory_space<smem>>
    %c0_1 = arith.constant 0 : index
    %c0_2 = arith.constant 0 : index
    %1 = memref.load %arg3[%c0_1, %c0_2] : memref<1x1xf32, #tpu.memory_space<smem>>
    %c0_3 = arith.constant 0 : index
    %c0_4 = arith.constant 0 : index
    %2 = vector.load %arg4[%c0_3, %c0_4] : memref<8x128xf32, #tpu.memory_space<vmem>>, vector<8x128xf32>
    %3 = vector.broadcast %0 : f32 to vector<8x128xf32>
    %4 = arith.mulf %3, %2 : vector<8x128xf32>
    %5 = vector.broadcast %1 : f32 to vector<8x128xf32>
    %6 = arith.addf %4, %5 : vector<8x128xf32>
    %c0_5 = arith.constant 0 : index
    %c0_6 = arith.constant 0 : index
    %7 = vector.load %arg5[%c0_5, %c0_6] : memref<8x128xf32, #tpu.memory_space<vmem>>, vector<8x128xf32>
    tpu.vector_store %arg5[%c0_5, %c0_6], %6 {strides = array<i32>} : memref<8x128xf32, #tpu.memory_space<vmem>>, vector<8x128xf32>,
    return
  }
  func.func @transform_0(%arg0: i32, %arg1: i32) -> (i32, i32) {
    %c0_i32 = arith.constant 0 : i32
    %c0_i32_0 = arith.constant 0 : i32
    %c0_i32_1 = arith.constant 0 : i32
    return %c0_i32, %c0_i32_0 : i32, i32
  }
  func.func @transform_1(%arg0: i32, %arg1: i32) -> (i32, i32) {
    %c0_i32 = arith.constant 0 : i32
    %c0_i32_0 = arith.constant 0 : i32
    %c0_i32_1 = arith.constant 0 : i32
    return %c0_i32, %c0_i32_0 : i32, i32
  }
  func.func @transform_2(%arg0: i32, %arg1: i32) -> (i32, i32) {
    %c0_i32 = arith.constant 0 : i32
    return %arg0, %arg1 : i32, i32
  }
  func.func @transform_3(%arg0: i32, %arg1: i32) -> (i32, i32) {
    %c0_i32 = arith.constant 0 : i32
    return %arg0, %arg1 : i32, i32
  }
}

</mosaic_0001>

<llo_original>
// kernel: tpu_custom_call.1
$region0: #{tpu_custom_call.1}
  #allocation0 [shape = 'u32[]', space=smem, size = 0x4, offset = 0x4, fixed_abs, tag = 'smem constant byte address 0x4 - core index']
  #allocation1 [shape = 'u32[144,128]{1,0:T(1,128)}', space=vmem, size = 0x12000, scoped, tag = 'internal scratch']
  #allocation2 [shape = 'f32[1,1]{1,0:T(1,128)S(6)}', space=smem, size = 0x200, scoped, tag = 'scoped memory for tpu_custom_call.1']
  #allocation3 [shape = 'f32[1,1]{1,0:T(1,128)S(6)}', space=smem, size = 0x200, scoped, tag = 'scoped memory for tpu_custom_call.1']
  %s0 = inlined_call_operand.<no memory space> [shape: f32[1,1], index: 0, kind: input, shape index: {}]
  %s1 = inlined_call_operand.<no memory space> [shape: f32[1,1], index: 1, kind: input, shape index: {}]
  %s2 = inlined_call_operand.hbm [shape: f32[8,128], index: 2, kind: input, shape index: {}]
  %s3 = inlined_call_operand.hbm [shape: f32[8,128], index: 3, kind: output, shape index: {}]
  %s4 = sld [smem:[#allocation0]]
  $region26: #{tpu_custom_call.1} parent=0
    _
  %s6 = ssub.s32 1, %s4
  %s7 = scalar_select 0, %s6, %s4
  %8 = sst [smem:[#allocation2]] %s0
  %9 = sst [smem:[#allocation3]] %s1
  $region1: #{tpu_custom_call.1} parent=0
    #allocation4 [shape = 'u8[4096]{0}', space=vmem, size = 0x1000, scoped, tag = 'input window, operand 2, single buffered']
    #allocation5 [shape = 's32[1]{0}', space=sflag, size = 0x4, scoped, tag = 'scoped memory for tpu_custom_call.1']
    #allocation6 [shape = 's32[1]{0}', space=sflag, size = 0x4, scoped, tag = 'scoped memory for tpu_custom_call.1']
    #allocation7 [shape = 'u8[4096]{0}', space=vmem, size = 0x1000, scoped, tag = 'output window, operand 0, single buffered']
    %10 = vsyncpa [#allocation5], 0
    %11 = vsyncpa [#allocation6], 0
    // Predicated region
    $region2: #{tpu_custom_call.1} parent=1 // pred_check
      _
    $region3: #{tpu_custom_call.1} parent=1 // pred_check_branch
      %13 = sbr.rel (0) target = $region5
    $region4: #{tpu_custom_call.1} parent=1 // pred_region
      _
    $region5: #{tpu_custom_call.1} parent=1 // pred_fallthru
      _
    // Predicated region
    $region6: #{tpu_custom_call.1} parent=1 // pred_check
      _
    $region7: #{tpu_custom_call.1} parent=1 // pred_check_branch
      %15 = sbr.rel (0) target = $region9
    $region8: #{tpu_custom_call.1} parent=1 // pred_region
      _
    $region9: #{tpu_custom_call.1} parent=1 // pred_fallthru
      _
    // Predicated region
    $region10: #{tpu_custom_call.1} parent=1 // pred_check
      _
    $region11: #{tpu_custom_call.1} parent=1 // pred_check_branch
      %17 = sbr.rel (0) target = $region13
    $region12: #{tpu_custom_call.1} parent=1 // pred_region
      %s19 = ssub.s32 128, 128
      %20 = vsyncadd [#allocation5], %s19
      %s22 = sshll.u32 [#allocation4], 4
      %s23 = int_to_ptr.vmem [resolvable:$true] %s22
      %25 = dma.hbm_to_vmem [thread:$0]  %s2, 128, %s23, [#allocation5]
    $region13: #{tpu_custom_call.1} parent=1 // pred_fallthru
      _
    // Predicated region
    $region14: #{tpu_custom_call.1} parent=1 // pred_check
      _
    $region15: #{tpu_custom_call.1} parent=1 // pred_check_branch
      %27 = sbr.rel (0) target = $region17
    $region16: #{tpu_custom_call.1} parent=1 // pred_region
      %28 = dma.done [#allocation5], 128
    $region17: #{tpu_custom_call.1} parent=1 // pred_fallthru
      _
    %s29 = sld [smem:[#allocation2]]
    %s30 = sld [smem:[#allocation3]]
    %v31 = vld [vmem:[#allocation4] sm:$0xff]
    %v32 = vstv %s29
    %v33 = vmul.f32 %v32, %v31
    %v34 = vstv %s30
    %v35 = vadd.f32 %v33, %v34
    %36 = vst [vmem:[#allocation7] sm:$0xff] %v35
    // Predicated region
    $region18: #{tpu_custom_call.1} parent=1 // pred_check
      _
    $region19: #{tpu_custom_call.1} parent=1 // pred_check_branch
      %38 = sbr.rel (0) target = $region21
    $region20: #{tpu_custom_call.1} parent=1 // pred_region
      %s40 = ssub.s32 128, 128
      %41 = vsyncadd [#allocation6], %s40
      %s43 = sshll.u32 [#allocation7], 4
      %s44 = int_to_ptr.vmem [resolvable:$true] %s43
      %46 = dma.vmem_to_hbm [thread:$0]  %s44, 128, %s3, [#allocation6]
    $region21: #{tpu_custom_call.1} parent=1 // pred_fallthru
      _
    // Predicated region
    $region22: #{tpu_custom_call.1} parent=1 // pred_check
      _
    $region23: #{tpu_custom_call.1} parent=1 // pred_check_branch
      %48 = sbr.rel (0) target = $region25
    $region24: #{tpu_custom_call.1} parent=1 // pred_region
      %49 = dma.done [#allocation6], 128
    $region25: #{tpu_custom_call.1} parent=1 // pred_fallthru
      _
    %50 = vsyncpa [#allocation5], 1
    %51 = vsyncpa [#allocation6], 1

</llo_original>
